<compile_context>
chip_gen: v5e
topology: v5e:2x2
jax: 0.10.0
libtpu: 0.0.40
codegen_flags: <defaults>
</compile_context>

<pallas_src>
import functools

import numpy as np
import jax
import jax.numpy as jnp
from jax.experimental import pallas as pl
from jax.experimental.pallas import tpu as pltpu


def _round_up(x, m):
    return ((x + m - 1) // m) * m


# -----------------------------------------------------------------------------
# Pair selector (equivalent of the PyTorch `pair_selector.get_pairs`):
# all (i, j) pairs with i < j, split into positive (same target) / negative.
# Vectorized with np.triu_indices (host-side glue, not the hot path).
# -----------------------------------------------------------------------------
def all_pairs_selector(target):
    t = np.asarray(target)
    iu, ju = np.triu_indices(t.shape[0], k=1)
    same = t[iu] == t[ju]
    pos = np.stack([iu[same], ju[same]], axis=1).astype(np.int32).reshape(-1, 2)
    neg = np.stack([iu[~same], ju[~same]], axis=1).astype(np.int32).reshape(-1, 2)
    return pos, neg


# -----------------------------------------------------------------------------
# Pallas kernel: one row-tile of the pairwise matrix per grid step.
# -----------------------------------------------------------------------------
def _contrastive_kernel(emb_ref, embt_ref, stats_ref, code_ref, out_ref, *,
                        margin, eps, inv_count, feat_dim):
    i = pl.program_id(0)

    @pl.when(i == 0)
    def _init():
        out_ref[...] = jnp.zeros_like(out_ref)

    ei_raw = emb_ref[...]                      # [TI, D]     native dtype (streamed)
    et_raw = embt_ref[...]                     # [D, B_pad]  native dtype (resident)

    # Gram block on the MXU: G[p, q] = <e_p, e_q>, f32 accumulation.
    gram = jnp.dot(ei_raw, et_raw, preferred_element_type=jnp.float32)  # [TI, B_pad]

    ei = ei_raw.astype(jnp.float32)
    ni = jnp.sum(ei * ei, axis=-1, keepdims=True)     # [TI, 1]  ||e_p||^2
    si = jnp.sum(ei, axis=-1, keepdims=True)          # [TI, 1]  sum_k e_pk

    stats = stats_ref[...]                            # [2, B_pad] f32 (resident)
    na = stats[0:1, :]                                # [1, B_pad] ||e_q||^2
    sa = stats[1:2, :]                                # [1, B_pad] sum_k e_qk

    # ||e_p - e_q + eps||^2 expanded analytically (matches F.pairwise_distance's
    # eps-added-to-the-difference behaviour).
    d2 = ni + na - 2.0 * gram + (2.0 * eps) * (si - sa) + feat_dim * eps * eps
    d2 = jnp.maximum(d2, 0.0)
    d = jnp.sqrt(d2)                                  # only the hinge needs sqrt

    code = code_ref[...]                              # [TI, B_pad] (streamed)
    mask = (code >= 0.0).astype(jnp.float32)          # selected pair?
    label = jnp.maximum(code, 0.0)                    # 0 = dissimilar, 1 = similar
    hinge = jnp.maximum(margin - d, 0.0)
    per_pair = mask * ((1.0 - label) * d2 + label * (hinge * hinge))

    partial = jnp.sum(jnp.sum(per_pair, axis=-1, keepdims=True),
                      axis=0, keepdims=True)          # [1, 1]
    out_ref[...] += partial

    @pl.when(i == pl.num_programs(0) - 1)
    def _finalize():
        out_ref[...] = out_ref[...] * inv_count


def online_contrastive_loss(embeddings, positive_pairs, negative_pairs, margin=2.0):
    """Forward pass of OnlineContrastiveLoss.  Matches the PyTorch module,
    including its label-ordering quirk: outputs are [pos; neg] while labels are
    [zeros(n_neg); ones(n_pos)], i.e. labels attach by *position* in that
    concatenation, not by pair identity."""
    B, D = embeddings.shape
    n_pos = int(positive_pairs.shape[0])
    n_neg = int(negative_pairs.shape[0])
    m = n_pos + n_neg

    # Sublane alignment: 8 rows for 4-byte dtypes, 16 for bf16, 32 for int8/fp8.
    row_align = max(8, 32 // max(int(embeddings.dtype.itemsize), 1))
    # Row-tile of the pair matrix.  256 rows keeps the double-buffered working
    # set (emb tile + code tile) well inside v5e's 16 MiB scoped-VMEM default
    # and v7x's 64 MiB physical VMEM for typical B, D; shrink tile_i or raise
    # vmem_limit_bytes for very large batches.
    tile_i = min(256, _round_up(max(B, 1), row_align))
    b_pad = _round_up(max(B, 1), tile_i)

    # ---- glue (plain JAX): pad, transpose, per-row stats, pair "code" matrix ----
    emb_p = jnp.pad(embeddings, ((0, b_pad - B), (0, 0)))          # native dtype
    emb_t = emb_p.T                                                # [D, B_pad]

    e32 = emb_p.astype(jnp.float32)
    stats = jnp.stack([jnp.sum(e32 * e32, axis=1),                 # ||e_q||^2
                       jnp.sum(e32, axis=1)], axis=0)              # sum_k e_qk

    # code[i, j]: -1 = not a selected pair, 0/1 = the label the PyTorch module
    # assigns to that pair (position-based label quirk preserved).  Assumes the
    # selector returns each (i, j) pair at most once.
    pairs = jnp.concatenate(
        [positive_pairs.astype(jnp.int32), negative_pairs.astype(jnp.int32)], axis=0)
    labels = jnp.concatenate(
        [jnp.zeros((n_neg,), jnp.float32), jnp.ones((n_pos,), jnp.float32)], axis=0)
    code = jnp.full((b_pad, b_pad), -1.0, dtype=jnp.float32)
    code = code.at[pairs[:, 0], pairs[:, 1]].set(labels)

    kernel = functools.partial(
        _contrastive_kernel,
        margin=float(margin),
        eps=1e-6,                                  # F.pairwise_distance default
        inv_count=1.0 / float(max(m, 1)),          # guard m == 0 (PyTorch would NaN)
        feat_dim=float(D),
    )

    out = pl.pallas_call(
        kernel,
        out_shape=jax.ShapeDtypeStruct((1, 1), jnp.float32),
        grid_spec=pltpu.PrefetchScalarGridSpec(
            num_scalar_prefetch=0,
            grid=(b_pad // tile_i,),
            in_specs=[
                pl.BlockSpec((tile_i, D), lambda i: (i, 0)),      # emb row tile (streamed)
                pl.BlockSpec((D, b_pad), lambda i: (0, 0)),       # emb^T (resident)
                pl.BlockSpec((2, b_pad), lambda i: (0, 0)),       # row stats (resident)
                pl.BlockSpec((tile_i, b_pad), lambda i: (i, 0)),  # code tile (streamed)
            ],
            out_specs=pl.BlockSpec((1, 1), lambda i: (0, 0)),     # resident accumulator
        ),
        compiler_params=pltpu.CompilerParams(
            dimension_semantics=("arbitrary",)),   # sequential reduction axis
        # TODO(synk): on v7x, add a leading size-2 "parallel" grid axis with a
        # [2, 1] partial-sum output to engage both TensorCores.
    )(emb_p, emb_t, stats, code)
    return out[0, 0]


# -----------------------------------------------------------------------------
# Pure-JAX reference (mirrors the PyTorch forward) for a correctness check.
# -----------------------------------------------------------------------------
def _reference_loss(embeddings, positive_pairs, negative_pairs, margin=2.0):
    out1 = jnp.concatenate(
        [embeddings[positive_pairs[:, 0]], embeddings[negative_pairs[:, 0]]], axis=0)
    out2 = jnp.concatenate(
        [embeddings[positive_pairs[:, 1]], embeddings[negative_pairs[:, 1]]], axis=0)
    label = jnp.concatenate(
        [jnp.zeros((negative_pairs.shape[0],)), jnp.ones((positive_pairs.shape[0],))])
    d = jnp.sqrt(jnp.sum((out1 - out2 + 1e-6) ** 2, axis=-1))
    loss = jnp.mean((1 - label) * d ** 2 + label * jnp.maximum(margin - d, 0.0) ** 2)
    return loss


if __name__ == "__main__":
    key = jax.random.PRNGKey(0)
    B, D = 8, 32
    embeddings = jax.random.normal(key, (B, D), dtype=jnp.float32)
    target = np.array([0, 0, 1, 1, 2, 2, 3, 3], dtype=np.int32)

    pos_pairs, neg_pairs = all_pairs_selector(target)
    pos_pairs = jnp.asarray(pos_pairs)
    neg_pairs = jnp.asarray(neg_pairs)

    loss = online_contrastive_loss(embeddings, pos_pairs, neg_pairs, margin=2.0)
    loss = jax.block_until_ready(loss)

    ref = _reference_loss(embeddings, pos_pairs, neg_pairs, margin=2.0)
    np.testing.assert_allclose(np.asarray(loss), np.asarray(ref), rtol=1e-4, atol=1e-6)

    print("KERNEL_OK")
</pallas_src>

<mosaic_0001>
module attributes {stable_mosaic.version = 11 : i64} {
  func.func @_contrastive_kernel(%arg0: i32, %arg1: memref<8x32xf32, #tpu.memory_space<vmem>>, %arg2: memref<32x8xf32, #tpu.memory_space<vmem>>, %arg3: memref<2x8xf32, #tpu.memory_space<vmem>>, %arg4: memref<8x8xf32, #tpu.memory_space<vmem>>, %arg5: memref<1x1xf32, #tpu.memory_space<vmem>>) attributes {dimension_semantics = [#tpu.dimension_semantics<arbitrary>], iteration_bounds = array<i64: 1>, scalar_prefetch = 0 : i64, scratch_operands = 0 : i64, tpu.core_type = #tpu.core_type<tc>, window_params = [{transform_indices = @transform_0, window_bounds = array<i64: 8, 32>}, {pipeline_mode = #tpu.pipeline_mode<synchronous>, transform_indices = @transform_1, window_bounds = array<i64: 32, 8>}, {pipeline_mode = #tpu.pipeline_mode<synchronous>, transform_indices = @transform_2, window_bounds = array<i64: 2, 8>}, {transform_indices = @transform_3, window_bounds = array<i64: 8, 8>}, {pipeline_mode = #tpu.pipeline_mode<synchronous>, transform_indices = @transform_4, window_bounds = array<i64: 1, 1>}]} {
    %c0_i32 = arith.constant 0 : i32
    %0 = arith.cmpi eq, %arg0, %c0_i32 : i32
    %1 = arith.extui %0 : i1 to i32
    %c0_i32_0 = arith.constant 0 : i32
    %2 = arith.cmpi ne, %1, %c0_i32_0 : i32
    scf.if %2 {
      %cst_27 = arith.constant 0.000000e+00 : f32
      %59 = vector.broadcast %cst_27 : f32 to vector<1x1xf32>
      %c0_28 = arith.constant 0 : index
      %c0_29 = arith.constant 0 : index
      %60 = vector.load %arg5[%c0_28, %c0_29] : memref<1x1xf32, #tpu.memory_space<vmem>>, vector<1x1xf32>
      tpu.vector_store %arg5[%c0_28, %c0_29], %59 {strides = array<i32>} : memref<1x1xf32, #tpu.memory_space<vmem>>, vector<1x1xf32>,
    } else {
    }
    %c0 = arith.constant 0 : index
    %c0_1 = arith.constant 0 : index
    %3 = vector.load %arg1[%c0, %c0_1] : memref<8x32xf32, #tpu.memory_space<vmem>>, vector<8x32xf32>
    %c0_2 = arith.constant 0 : index
    %c0_3 = arith.constant 0 : index
    %4 = vector.load %arg2[%c0_2, %c0_3] : memref<32x8xf32, #tpu.memory_space<vmem>>, vector<32x8xf32>
    %cst = arith.constant dense<0.000000e+00> : vector<8x8xf32>
    %5 = tpu.matmul %3, %4, %cst {dimension_numbers = #tpu.dot_dimension_numbers<[1], [0], [0], [1], [0, 0, 1, 1], [], []>} : vector<8x32xf32>, vector<32x8xf32>, vector<8x8xf32> -> vector<8x8xf32>
    %6 = arith.mulf %3, %3 : vector<8x32xf32>
    %cst_4 = arith.constant dense<0.000000e+00> : vector<8xf32>
    %7 = vector.multi_reduction <add>, %6, %cst_4 [1] : vector<8x32xf32> to vector<8xf32>
    %8 = vector.shape_cast %7 : vector<8xf32> to vector<8x1xf32>
    %cst_5 = arith.constant dense<0.000000e+00> : vector<8xf32>
    %9 = vector.multi_reduction <add>, %3, %cst_5 [1] : vector<8x32xf32> to vector<8xf32>
    %10 = vector.shape_cast %9 : vector<8xf32> to vector<8x1xf32>
    %c0_6 = arith.constant 0 : index
    %c0_7 = arith.constant 0 : index
    %11 = vector.load %arg3[%c0_6, %c0_7] : memref<2x8xf32, #tpu.memory_space<vmem>>, vector<2x8xf32>
    %12 = vector.extract_strided_slice %11 {offsets = [0, 0], sizes = [1, 8], strides = [1, 1]} : vector<2x8xf32> to vector<1x8xf32>
    %13 = vector.extract_strided_slice %11 {offsets = [1, 0], sizes = [1, 8], strides = [1, 1]} : vector<2x8xf32> to vector<1x8xf32>
    %14 = vector.broadcast %8 : vector<8x1xf32> to vector<8x8xf32>
    %15 = vector.broadcast %12 : vector<1x8xf32> to vector<8x8xf32>
    %16 = arith.addf %14, %15 : vector<8x8xf32>
    %cst_8 = arith.constant 2.000000e+00 : f32
    %17 = vector.broadcast %cst_8 : f32 to vector<8x8xf32>
    %18 = arith.mulf %17, %5 : vector<8x8xf32>
    %19 = arith.subf %16, %18 : vector<8x8xf32>
    %20 = vector.broadcast %10 : vector<8x1xf32> to vector<8x8xf32>
    %21 = vector.broadcast %13 : vector<1x8xf32> to vector<8x8xf32>
    %22 = arith.subf %20, %21 : vector<8x8xf32>
    %cst_9 = arith.constant 2.000000e-06 : f32
    %23 = vector.broadcast %cst_9 : f32 to vector<8x8xf32>
    %24 = arith.mulf %23, %22 : vector<8x8xf32>
    %25 = arith.addf %19, %24 : vector<8x8xf32>
    %cst_10 = arith.constant 3.200000e-11 : f32
    %26 = vector.broadcast %cst_10 : f32 to vector<8x8xf32>
    %27 = arith.addf %25, %26 : vector<8x8xf32>
    %cst_11 = arith.constant 0.000000e+00 : f32
    %28 = vector.broadcast %cst_11 : f32 to vector<8x8xf32>
    %29 = arith.maximumf %27, %28 : vector<8x8xf32>
    %30 = math.sqrt %29 : vector<8x8xf32>
    %c0_12 = arith.constant 0 : index
    %c0_13 = arith.constant 0 : index
    %31 = vector.load %arg4[%c0_12, %c0_13] : memref<8x8xf32, #tpu.memory_space<vmem>>, vector<8x8xf32>
    %cst_14 = arith.constant 0.000000e+00 : f32
    %32 = vector.broadcast %cst_14 : f32 to vector<8x8xf32>
    %33 = arith.cmpf oge, %31, %32 : vector<8x8xf32>
    %34 = arith.extui %33 : vector<8x8xi1> to vector<8x8xi32>
    %35 = arith.sitofp %34 : vector<8x8xi32> to vector<8x8xf32>
    %cst_15 = arith.constant 0.000000e+00 : f32
    %36 = vector.broadcast %cst_15 : f32 to vector<8x8xf32>
    %37 = arith.maximumf %31, %36 : vector<8x8xf32>
    %cst_16 = arith.constant 2.000000e+00 : f32
    %38 = vector.broadcast %cst_16 : f32 to vector<8x8xf32>
    %39 = arith.subf %38, %30 : vector<8x8xf32>
    %cst_17 = arith.constant 0.000000e+00 : f32
    %40 = vector.broadcast %cst_17 : f32 to vector<8x8xf32>
    %41 = arith.maximumf %39, %40 : vector<8x8xf32>
    %cst_18 = arith.constant 1.000000e+00 : f32
    %42 = vector.broadcast %cst_18 : f32 to vector<8x8xf32>
    %43 = arith.subf %42, %37 : vector<8x8xf32>
    %44 = arith.mulf %43, %29 : vector<8x8xf32>
    %45 = arith.mulf %41, %41 : vector<8x8xf32>
    %46 = arith.mulf %37, %45 : vector<8x8xf32>
    %47 = arith.addf %44, %46 : vector<8x8xf32>
    %48 = arith.mulf %35, %47 : vector<8x8xf32>
    %cst_19 = arith.constant dense<0.000000e+00> : vector<8xf32>
    %49 = vector.multi_reduction <add>, %48, %cst_19 [1] : vector<8x8xf32> to vector<8xf32>
    %50 = vector.shape_cast %49 : vector<8xf32> to vector<8x1xf32>
    %cst_20 = arith.constant dense<0.000000e+00> : vector<1xf32>
    %51 = vector.multi_reduction <add>, %50, %cst_20 [0] : vector<8x1xf32> to vector<1xf32>
    %52 = vector.shape_cast %51 : vector<1xf32> to vector<1x1xf32>
    %c0_21 = arith.constant 0 : index
    %c0_22 = arith.constant 0 : index
    %53 = vector.load %arg5[%c0_21, %c0_22] : memref<1x1xf32, #tpu.memory_space<vmem>>, vector<1x1xf32>
    %54 = arith.addf %53, %52 : vector<1x1xf32>
    %c0_23 = arith.constant 0 : index
    %c0_24 = arith.constant 0 : index
    %55 = vector.load %arg5[%c0_23, %c0_24] : memref<1x1xf32, #tpu.memory_space<vmem>>, vector<1x1xf32>
    tpu.vector_store %arg5[%c0_23, %c0_24], %54 {strides = array<i32>} : memref<1x1xf32, #tpu.memory_space<vmem>>, vector<1x1xf32>,
    %c0_i32_25 = arith.constant 0 : i32
    %56 = arith.cmpi eq, %arg0, %c0_i32_25 : i32
    %57 = arith.extui %56 : i1 to i32
    %c0_i32_26 = arith.constant 0 : i32
    %58 = arith.cmpi ne, %57, %c0_i32_26 : i32
    scf.if %58 {
      %c0_27 = arith.constant 0 : index
      %c0_28 = arith.constant 0 : index
      %59 = vector.load %arg5[%c0_27, %c0_28] : memref<1x1xf32, #tpu.memory_space<vmem>>, vector<1x1xf32>
      %cst_29 = arith.constant 0.0357142873 : f32
      %60 = vector.broadcast %cst_29 : f32 to vector<1x1xf32>
      %61 = arith.mulf %59, %60 : vector<1x1xf32>
      %c0_30 = arith.constant 0 : index
      %c0_31 = arith.constant 0 : index
      %62 = vector.load %arg5[%c0_30, %c0_31] : memref<1x1xf32, #tpu.memory_space<vmem>>, vector<1x1xf32>
      tpu.vector_store %arg5[%c0_30, %c0_31], %61 {strides = array<i32>} : memref<1x1xf32, #tpu.memory_space<vmem>>, vector<1x1xf32>,
    } else {
    }
    return
  }
  func.func @transform_0(%arg0: i32) -> (i32, i32) {
    %c0_i32 = arith.constant 0 : i32
    %c0_i32_0 = arith.constant 0 : i32
    return %arg0, %c0_i32 : i32, i32
  }
  func.func @transform_1(%arg0: i32) -> (i32, i32) {
    %c0_i32 = arith.constant 0 : i32
    %c0_i32_0 = arith.constant 0 : i32
    %c0_i32_1 = arith.constant 0 : i32
    return %c0_i32, %c0_i32_0 : i32, i32
  }
  func.func @transform_2(%arg0: i32) -> (i32, i32) {
    %c0_i32 = arith.constant 0 : i32
    %c0_i32_0 = arith.constant 0 : i32
    %c0_i32_1 = arith.constant 0 : i32
    return %c0_i32, %c0_i32_0 : i32, i32
  }
  func.func @transform_3(%arg0: i32) -> (i32, i32) {
    %c0_i32 = arith.constant 0 : i32
    %c0_i32_0 = arith.constant 0 : i32
    return %arg0, %c0_i32 : i32, i32
  }
  func.func @transform_4(%arg0: i32) -> (i32, i32) {
    %c0_i32 = arith.constant 0 : i32
    %c0_i32_0 = arith.constant 0 : i32
    %c0_i32_1 = arith.constant 0 : i32
    return %c0_i32, %c0_i32_0 : i32, i32
  }
}

</mosaic_0001>

<llo_original>
// kernel: tpu_custom_call.1
$region0: #{tpu_custom_call.1}
  #allocation0 [shape = 'u32[]', space=smem, size = 0x4, offset = 0x4, fixed_abs, tag = 'smem constant byte address 0x4 - core index']
  #allocation1 [shape = 'u32[72,128]{1,0:T(1,128)}', space=vmem, size = 0x9000, scoped, tag = 'internal scratch']
  %s0 = inlined_call_operand.vmem [shape: f32[8,32], index: 0, kind: input, shape index: {}]
  %s1 = inlined_call_operand.vmem [shape: f32[32,8], index: 1, kind: input, shape index: {}]
  %s2 = inlined_call_operand.vmem [shape: f32[2,8], index: 2, kind: input, shape index: {}]
  %s3 = inlined_call_operand.vmem [shape: f32[8,8], index: 3, kind: input, shape index: {}]
  %s4 = inlined_call_operand.hbm [shape: f32[1,1], index: 4, kind: output, shape index: {}]
  %s5 = sld [smem:[#allocation0]]
  $region34: #{tpu_custom_call.1} parent=0
    _
  %s7 = ssub.s32 1, %s5
  %s8 = scalar_select 0, %s7, %s5
  $region1: #{tpu_custom_call.1} parent=0
    #allocation2 [shape = 'u8[512]{0}', space=vmem, size = 0x400, scoped, tag = 'output window, operand 0, single buffered']
    #allocation3 [shape = 's32[1]{0}', space=sflag, size = 0x4, scoped, tag = 'scoped memory for tpu_custom_call.1']
    %9 = vsyncpa [#allocation3], 0
    // Predicated region
    $region2: #{tpu_custom_call.1} parent=1 // pred_check
      _
    $region3: #{tpu_custom_call.1} parent=1 // pred_check_branch
      %11 = sbr.rel (0) target = $region5
    $region4: #{tpu_custom_call.1} parent=1 // pred_region
      _
    $region5: #{tpu_custom_call.1} parent=1 // pred_fallthru
      _
    // Predicated region
    $region6: #{tpu_custom_call.1} parent=1 // pred_check
      _
    $region7: #{tpu_custom_call.1} parent=1 // pred_check_branch
      %13 = sbr.rel (0) target = $region9
    $region8: #{tpu_custom_call.1} parent=1 // pred_region
      _
    $region9: #{tpu_custom_call.1} parent=1 // pred_fallthru
      _
    // Predicated region
    $region10: #{tpu_custom_call.1} parent=1 // pred_check
      _
    $region11: #{tpu_custom_call.1} parent=1 // pred_check_branch
      %15 = sbr.rel (0) target = $region13
    $region12: #{tpu_custom_call.1} parent=1 // pred_region
      _
    $region13: #{tpu_custom_call.1} parent=1 // pred_fallthru
      _
    // Predicated region
    $region14: #{tpu_custom_call.1} parent=1 // pred_check
      _
    $region15: #{tpu_custom_call.1} parent=1 // pred_check_branch
      %17 = sbr.rel (0) target = $region17
    $region16: #{tpu_custom_call.1} parent=1 // pred_region
      _
    $region17: #{tpu_custom_call.1} parent=1 // pred_fallthru
      _
    %p18 = scmp.eq.s32.totalorder 0, 0
    // Predicated region
    $region18: #{tpu_custom_call.1} parent=1 // pred_check
      %p19 = pneg %p18
    $region19: #{tpu_custom_call.1} parent=1 // pred_check_branch
      %21 = sbr.rel (%p19) target = $region21
    $region20: #{tpu_custom_call.1} parent=1 // pred_region
      %vm22 = vcmask 0
      %23 = vst.msk [vmem:[#allocation2] sm:$0x1] %vm22, 0.0
    $region21: #{tpu_custom_call.1} parent=1 // pred_fallthru
      _
    %v24 = vld [vmem:[%s0] sm:$0xff]
    %v25 = vld [vmem:[%s1] sm:$0xff]
    %v26 = vld [vmem:[%s1 + $0x8] sm:$0xff]
    %v27 = vld [vmem:[%s1 + $0x10] sm:$0xff]
    %v28 = vld [vmem:[%s1 + $0x18] sm:$0xff]
    %vm29 = vcmask 261120
    %v31 = vsel %vm29, %v24, 0
    %33 = vmatpush.msra.mxu0 0.0
    %34 = vmatpush.msra.mxu0 0.0
    %35 = vmatpush.msra.mxu0 0.0
    %36 = vmatpush.msra.mxu0 0.0
    %37 = vmatpush.msra.mxu0 0.0
    %38 = vmatpush.msra.mxu0 0.0
    %39 = vmatpush.msra.mxu0 0.0
    %40 = vmatpush.msra.mxu0 0.0
    %41 = vmatpush.msra.mxu0 0.0
    %42 = vmatpush.msra.mxu0 0.0
    %43 = vmatpush.msra.mxu0 0.0
    %44 = vmatpush.msra.mxu0 0.0
    %45 = vmatpush.msra.mxu0 %v28
    %46 = vmatpush.msra.mxu0 %v27
    %47 = vmatpush.msra.mxu0 %v26
    %48 = vmatpush.msra.mxu0 %v25
    %49 = vmatmul.f32.gmra.mxu0 %v31
    %v50 = vpop.f32.mrf.mxu0
    %v51 = vadd.f32 0.0, %v50
    %52 = vdwg.mxu0
    %v53 = vmul.f32 %v24, %v24
    %v54 = vsel %vm29, %v53, 0.0
    %55 = vadd.xlane.f32.xlu0 %v54
    %v56 = vpop.xlane.xlu0 %55
    %v57 = vsel %vm29, %v24, 0.0
    %58 = vadd.xlane.f32.xlu0 %v57
    %v59 = vpop.xlane.xlu0 %58
    %v60 = vld [vmem:[%s2] sm:$0x3]
    %v61 = vperm.slane %v60, 0
    %v62 = vadd.f32 %v56, %v61
    %v63 = vmul.f32 %v51, 2.0
    %v64 = vsub.f32 %v62, %v63
    %v65 = vperm.slane %v60, 1
    %v66 = vsub.f32 %v59, %v65
    %v67 = vmul.f32 %v66, 2e-06
    %v68 = vadd.f32 %v64, %v67
    %v69 = vadd.f32 %v68, 3.2e-11
    %v70 = vmax.f32 %v69, 0.0
    %v71 = vrsqrt.pop %v70
    %v72 = vmul.f32 %v71, %v70
    %v73 = vmul.f32 %v72, %v71
    %v74 = vmul.f32 0.5, %v73
    %v75 = vsub.f32 1.5, %v74
    %v76 = vmul.f32 %v71, %v75
    %v77 = vmul.f32 %v70, %v76
    %vm78 = vcmp.eq.f32.partialorder %v70, inf
    %v79 = vsel %vm78, %v70, %v77
    %vm80 = vcmp.eq.f32.partialorder %v70, 0.0
    %v81 = vand.u32 %v70, 2147483648
    %v82 = vsel %vm80, %v81, %v79
    %v83 = vld [vmem:[%s3] sm:$0xff]
    %vm84 = vcmp.ge.f32.partialorder %v83, 0.0
    %v85 = vsel %vm84, 1, 0
    %v86 = vcvt.s32.f32 %v85
    %v87 = vmax.f32 %v83, 0.0
    %v88 = vsub.f32 2.0, %v82
    %v89 = vmax.f32 %v88, 0.0
    %v90 = vsub.f32 1.0, %v87
    %v91 = vmul.f32 %v90, %v70
    %v92 = vmul.f32 %v89, %v89
    %v93 = vmul.f32 %v87, %v92
    %v94 = vadd.f32 %v91, %v93
    %v95 = vmul.f32 %v86, %v94
    %vm96 = vcmask 64512
    %v97 = vsel %vm96, %v95, 0.0
    %98 = vadd.xlane.f32.xlu0 %v97
    %v99 = vpop.xlane.xlu0 %98
    %v100 = vrot.slane %v99, 4
    %v101 = vadd.f32 %v99, %v100
    %v102 = vrot.slane %v101, 2
    %v103 = vadd.f32 %v101, %v102
    %v104 = vrot.slane %v103, 1
    %v105 = vadd.f32 %v103, %v104
    %v106 = vld [vmem:[#allocation2] sm:$0x1]
    %v107 = vadd.f32 %v106, %v105
    %vm108 = vcmask 0
    %109 = vst.msk [vmem:[#allocation2] sm:$0x1] %vm108, %v107
    // Predicated region
    $region22: #{tpu_custom_call.1} parent=1 // pred_check
      %p110 = pneg %p18
    $region23: #{tpu_custom_call.1} parent=1 // pred_check_branch
      %112 = sbr.rel (%p110) target = $region25
    $region24: #{tpu_custom_call.1} parent=1 // pred_region
      %v113 = vld [vmem:[#allocation2] sm:$0x1]
      %v114 = vmul.f32 %v113, 0.035714287
      %115 = vst.msk [vmem:[#allocation2] sm:$0x1] %vm108, %v114
    $region25: #{tpu_custom_call.1} parent=1 // pred_fallthru
      _
    // Predicated region
    $region26: #{tpu_custom_call.1} parent=1 // pred_check
      _
    $region27: #{tpu_custom_call.1} parent=1 // pred_check_branch
      %117 = sbr.rel (0) target = $region29
    $region28: #{tpu_custom_call.1} parent=1 // pred_region
      %119 = vsyncadd [#allocation3], 0
      %s121 = sshll.u32 [#allocation2], 4
      %s122 = int_to_ptr.vmem [resolvable:$true] %s121
      %s123 = sshll.u32 %s4, 4
      %s124 = int_to_ptr.hbm [resolvable:$true] %s123
      %126 = dma.vmem_to_hbm [thread:$0]  %s122, 16, %s124, [#allocation3]
    $region29: #{tpu_custom_call.1} parent=1 // pred_fallthru
      _
    // Predicated region
    $region30: #{tpu_custom_call.1} parent=1 // pred_check
      _
    $region31: #{tpu_custom_call.1} parent=1 // pred_check_branch
      %128 = sbr.rel (0) target = $region33
    $region32: #{tpu_custom_call.1} parent=1 // pred_region
      %130 = dma.done [#allocation3], 16
    $region33: #{tpu_custom_call.1} parent=1 // pred_fallthru
      _
    %131 = vsyncpa [#allocation3], 1

</llo_original>
